<compile_context>
chip_gen: v6e
topology: v6e:2x2x1
jax: 0.10.0
libtpu: 0.0.40
codegen_flags: <defaults>
</compile_context>

<pallas_src>
import functools

import jax
import jax.numpy as jnp
from jax.experimental import pallas as pl
from jax.experimental.pallas import tpu as pltpu


def _round_up(n, m):
    return (n + m - 1) // m * m


def _vmem_limit_bytes():
    # ~3/4 of physical per-core VMEM (96 MiB on v5e/v6e, 48 MiB on v7x);
    # fall back to a safe value if the query is unavailable.
    try:
        cap = pltpu.get_tpu_info().vmem_capacity_bytes
    except Exception:
        cap = 128 * 2**20
    return min(int(cap * 3 // 4), 96 * 2**20)


def prenorm_kernel(x_ref, gamma_ref, beta_ref, w_ref, b_ref, o_ref, *, eps, d_valid):
    # x_ref:     (TM, D_pad)   input rows (full feature row, needed for LN stats)
    # gamma_ref: (1, D_pad)    LayerNorm weight  (zero in padded lanes)
    # beta_ref:  (1, D_pad)    LayerNorm bias    (zero in padded lanes)
    # w_ref:     (D_pad, TN)   Linear weight tile, (in, out) layout
    # b_ref:     (1, TN)       Linear bias tile
    # o_ref:     (TM, TN)      output tile
    x = x_ref[...].astype(jnp.float32)
    d_pad = x.shape[-1]
    inv_d = 1.0 / d_valid

    # --- LayerNorm over the true feature width (padded lanes of x are zero) ---
    mean = jnp.sum(x, axis=-1, keepdims=True) * inv_d
    centered = x - mean
    sq = centered * centered
    if d_valid != d_pad:  # mask padded lanes out of the variance sum only
        lane = jax.lax.broadcasted_iota(jnp.int32, x.shape, dimension=1)
        sq = jnp.where(lane < d_valid, sq, 0.0)
    var = jnp.sum(sq, axis=-1, keepdims=True) * inv_d
    inv = jax.lax.rsqrt(var + eps)

    # Fold gamma into the per-row scale.  Padded lanes of gamma/beta are zero,
    # so `normed` is exactly zero there and padded weight rows contribute nothing.
    normed = centered * (inv * gamma_ref[...]) + beta_ref[...]

    # --- fn = Linear(dim, dim): y = normed @ W^T + b (W passed pre-transposed) ---
    y = jnp.dot(normed.astype(w_ref.dtype), w_ref[...],
                preferred_element_type=jnp.float32)
    o_ref[...] = (y + b_ref[...]).astype(o_ref.dtype)


def prenorm(x, gamma, beta, w_t, b, *, eps=1e-5, target_tile_rows=512):
    """x: [B, S, D] -> [B, S, D]."""
    B, S, D = x.shape
    rows = B * S
    d_pad = _round_up(D, 128)

    in_dtype = x.dtype
    in_isz = jnp.dtype(in_dtype).itemsize
    w_isz = jnp.dtype(w_t.dtype).itemsize

    # Column tile of the weight: keep W fully resident for moderate D, tile the
    # output columns for very large D so the resident weight stays D*tile_cols.
    if d_pad <= 2048:
        tile_cols = d_pad
    elif d_pad % 512 == 0:
        tile_cols = 512
    elif d_pad % 256 == 0:
        tile_cols = 256
    else:
        tile_cols = 128
    w_invariant = tile_cols == d_pad

    vmem_limit = _vmem_limit_bytes()
    budget = int(vmem_limit * 0.6)

    tm = min(_round_up(rows, 8), _round_up(target_tile_rows, 8))

    def tile_bytes(tm_):
        x_b = 2 * tm_ * d_pad * in_isz                        # double-buffered input
        o_b = 2 * tm_ * tile_cols * in_isz                    # double-buffered output
        w_b = (1 if w_invariant else 2) * d_pad * tile_cols * w_isz
        p_b = 4 * d_pad * 4                                   # gamma/beta/bias
        return x_b + o_b + w_b + p_b

    while tm > 8 and tile_bytes(tm) > budget:
        tm = max(8, _round_up(tm // 2, 8))

    rows_pad = _round_up(rows, tm)
    grid = (rows_pad // tm, d_pad // tile_cols)

    # Zero-pad everything to lane-dense shapes (zero padding keeps math exact).
    x2 = jnp.pad(x.reshape(rows, D), ((0, rows_pad - rows), (0, d_pad - D)))
    gamma2 = jnp.pad(gamma.reshape(1, D), ((0, 0), (0, d_pad - D)))
    beta2 = jnp.pad(beta.reshape(1, D), ((0, 0), (0, d_pad - D)))
    b2 = jnp.pad(b.reshape(1, D), ((0, 0), (0, d_pad - D)))
    w2 = jnp.pad(w_t, ((0, d_pad - D), (0, d_pad - D)))

    kernel = functools.partial(prenorm_kernel, eps=eps, d_valid=D)

    cost = pl.CostEstimate(
        flops=2 * rows_pad * d_pad * d_pad,
        transcendentals=rows_pad * (d_pad // tile_cols),
        bytes_accessed=(rows_pad * d_pad * in_isz * 2
                        + d_pad * d_pad * w_isz
                        + 3 * d_pad * 4),
    )

    def run(single_buffer_invariants):
        def spec(shape, index_map, invariant):
            if single_buffer_invariants and invariant:
                return pl.BlockSpec(shape, index_map, pipeline_mode=pl.Buffered(1))
            return pl.BlockSpec(shape, index_map)

        in_specs = [
            pl.BlockSpec((tm, d_pad), lambda i, j: (i, 0)),              # x rows
            spec((1, d_pad), lambda i, j: (0, 0), True),                 # gamma
            spec((1, d_pad), lambda i, j: (0, 0), True),                 # beta
            spec((d_pad, tile_cols), lambda i, j: (0, j), w_invariant),  # W^T tile
            spec((1, tile_cols), lambda i, j: (0, j), w_invariant),      # bias tile
        ]
        out_specs = pl.BlockSpec((tm, tile_cols), lambda i, j: (i, j))

        return pl.pallas_call(
            kernel,
            out_shape=jax.ShapeDtypeStruct((rows_pad, d_pad), in_dtype),
            grid_spec=pltpu.PrefetchScalarGridSpec(
                num_scalar_prefetch=0,
                grid=grid,
                in_specs=in_specs,
                out_specs=out_specs,
            ),
            compiler_params=pltpu.CompilerParams(
                dimension_semantics=("parallel", "parallel"),
                vmem_limit_bytes=vmem_limit,
            ),
            cost_estimate=cost,
        )(x2, gamma2, beta2, w2, b2)

    try:
        out = run(single_buffer_invariants=True)
    except Exception:
        # Fallback if this JAX build rejects pl.Buffered(1) single-buffering.
        out = run(single_buffer_invariants=False)

    return out[:rows, :D].reshape(B, S, D)


def prenorm_reference(x, gamma, beta, w_t, b, eps=1e-5):
    xf = x.astype(jnp.float32)
    mean = jnp.mean(xf, axis=-1, keepdims=True)
    var = jnp.mean((xf - mean) ** 2, axis=-1, keepdims=True)
    normed = (xf - mean) * jax.lax.rsqrt(var + eps) * gamma + beta
    return (normed @ w_t.astype(jnp.float32) + b).astype(x.dtype)


if __name__ == "__main__":
    B, S, D = 2, 8, 32
    key = jax.random.PRNGKey(0)
    kx, kw, kb = jax.random.split(key, 3)

    x = jax.random.normal(kx, (B, S, D), dtype=jnp.float32)

    # LayerNorm params: PyTorch default init (weight=1, bias=0).
    gamma = jnp.ones((D,), dtype=jnp.float32)
    beta = jnp.zeros((D,), dtype=jnp.float32)

    # Deterministic Linear(dim, dim) params; stored pre-transposed as (in, out).
    w_t = 0.05 * jax.random.normal(kw, (D, D), dtype=jnp.float32)
    b = 0.01 * jax.random.normal(kb, (D,), dtype=jnp.float32)

    out = prenorm(x, gamma, beta, w_t, b)
    jax.block_until_ready(out)

    ref = prenorm_reference(x, gamma, beta, w_t, b)
    assert out.shape == (B, S, D)
    assert jnp.allclose(out, ref, atol=1e-4, rtol=1e-4), "mismatch vs reference"

    print("KERNEL_OK")
</pallas_src>

<mosaic_0001>
module attributes {stable_mosaic.version = 11 : i64} {
  func.func @prenorm_kernel(%arg0: i32, %arg1: i32, %arg2: memref<16x128xf32, #tpu.memory_space<vmem>>, %arg3: memref<1x128xf32, #tpu.memory_space<vmem>>, %arg4: memref<1x128xf32, #tpu.memory_space<vmem>>, %arg5: memref<128x128xf32, #tpu.memory_space<vmem>>, %arg6: memref<1x128xf32, #tpu.memory_space<vmem>>, %arg7: memref<16x128xf32, #tpu.memory_space<vmem>>) attributes {dimension_semantics = [#tpu.dimension_semantics<parallel>, #tpu.dimension_semantics<parallel>], iteration_bounds = array<i64: 1, 1>, scalar_prefetch = 0 : i64, scratch_operands = 0 : i64, tpu.core_type = #tpu.core_type<tc>, window_params = [{transform_indices = @transform_0, window_bounds = array<i64: 16, 128>}, {pipeline_mode = #tpu.pipeline_mode<synchronous>, transform_indices = @transform_1, window_bounds = array<i64: 1, 128>}, {pipeline_mode = #tpu.pipeline_mode<synchronous>, transform_indices = @transform_2, window_bounds = array<i64: 1, 128>}, {pipeline_mode = #tpu.pipeline_mode<synchronous>, transform_indices = @transform_3, window_bounds = array<i64: 128, 128>}, {pipeline_mode = #tpu.pipeline_mode<synchronous>, transform_indices = @transform_4, window_bounds = array<i64: 1, 128>}, {transform_indices = @transform_5, window_bounds = array<i64: 16, 128>}]} {
    %c0 = arith.constant 0 : index
    %c0_0 = arith.constant 0 : index
    %0 = vector.load %arg2[%c0, %c0_0] : memref<16x128xf32, #tpu.memory_space<vmem>>, vector<16x128xf32>
    %cst = arith.constant dense<0.000000e+00> : vector<16xf32>
    %1 = vector.multi_reduction <add>, %0, %cst [1] : vector<16x128xf32> to vector<16xf32>
    %2 = vector.shape_cast %1 : vector<16xf32> to vector<16x1xf32>
    %cst_1 = arith.constant 3.125000e-02 : f32
    %3 = vector.broadcast %cst_1 : f32 to vector<16x1xf32>
    %4 = arith.mulf %2, %3 : vector<16x1xf32>
    %5 = vector.broadcast %4 : vector<16x1xf32> to vector<16x128xf32>
    %6 = arith.subf %0, %5 : vector<16x128xf32>
    %7 = arith.mulf %6, %6 : vector<16x128xf32>
    %8 = tpu.iota {dimensions = array<i32: 1>} : vector<16x128xi32>
    %c32_i32 = arith.constant 32 : i32
    %9 = vector.broadcast %c32_i32 : i32 to vector<16x128xi32>
    %10 = arith.cmpi slt, %8, %9 : vector<16x128xi32>
    %cst_2 = arith.constant 0.000000e+00 : f32
    %11 = vector.broadcast %cst_2 : f32 to vector<16x128xf32>
    %12 = arith.select %10, %7, %11 : vector<16x128xi1>, vector<16x128xf32>
    %cst_3 = arith.constant dense<0.000000e+00> : vector<16xf32>
    %13 = vector.multi_reduction <add>, %12, %cst_3 [1] : vector<16x128xf32> to vector<16xf32>
    %14 = vector.shape_cast %13 : vector<16xf32> to vector<16x1xf32>
    %cst_4 = arith.constant 3.125000e-02 : f32
    %15 = vector.broadcast %cst_4 : f32 to vector<16x1xf32>
    %16 = arith.mulf %14, %15 : vector<16x1xf32>
    %cst_5 = arith.constant 9.99999974E-6 : f32
    %17 = vector.broadcast %cst_5 : f32 to vector<16x1xf32>
    %18 = arith.addf %16, %17 : vector<16x1xf32>
    %19 = math.rsqrt %18 : vector<16x1xf32>
    %c0_6 = arith.constant 0 : index
    %c0_7 = arith.constant 0 : index
    %20 = vector.load %arg3[%c0_6, %c0_7] : memref<1x128xf32, #tpu.memory_space<vmem>>, vector<1x128xf32>
    %21 = vector.broadcast %19 : vector<16x1xf32> to vector<16x128xf32>
    %22 = vector.broadcast %20 : vector<1x128xf32> to vector<16x128xf32>
    %23 = arith.mulf %21, %22 : vector<16x128xf32>
    %24 = arith.mulf %6, %23 : vector<16x128xf32>
    %c0_8 = arith.constant 0 : index
    %c0_9 = arith.constant 0 : index
    %25 = vector.load %arg4[%c0_8, %c0_9] : memref<1x128xf32, #tpu.memory_space<vmem>>, vector<1x128xf32>
    %26 = vector.broadcast %25 : vector<1x128xf32> to vector<16x128xf32>
    %27 = arith.addf %24, %26 : vector<16x128xf32>
    %c0_10 = arith.constant 0 : index
    %c0_11 = arith.constant 0 : index
    %28 = vector.load %arg5[%c0_10, %c0_11] : memref<128x128xf32, #tpu.memory_space<vmem>>, vector<128x128xf32>
    %cst_12 = arith.constant dense<0.000000e+00> : vector<16x128xf32>
    %29 = tpu.matmul %27, %28, %cst_12 {dimension_numbers = #tpu.dot_dimension_numbers<[1], [0], [0], [1], [0, 0, 1, 1], [], []>} : vector<16x128xf32>, vector<128x128xf32>, vector<16x128xf32> -> vector<16x128xf32>
    %c0_13 = arith.constant 0 : index
    %c0_14 = arith.constant 0 : index
    %30 = vector.load %arg6[%c0_13, %c0_14] : memref<1x128xf32, #tpu.memory_space<vmem>>, vector<1x128xf32>
    %31 = vector.broadcast %30 : vector<1x128xf32> to vector<16x128xf32>
    %32 = arith.addf %29, %31 : vector<16x128xf32>
    %c0_15 = arith.constant 0 : index
    %c0_16 = arith.constant 0 : index
    %33 = vector.load %arg7[%c0_15, %c0_16] : memref<16x128xf32, #tpu.memory_space<vmem>>, vector<16x128xf32>
    tpu.vector_store %arg7[%c0_15, %c0_16], %32 {strides = array<i32>} : memref<16x128xf32, #tpu.memory_space<vmem>>, vector<16x128xf32>,
    return
  }
  func.func @transform_0(%arg0: i32, %arg1: i32) -> (i32, i32) {
    %c0_i32 = arith.constant 0 : i32
    %c0_i32_0 = arith.constant 0 : i32
    return %arg0, %c0_i32 : i32, i32
  }
  func.func @transform_1(%arg0: i32, %arg1: i32) -> (i32, i32) {
    %c0_i32 = arith.constant 0 : i32
    %c0_i32_0 = arith.constant 0 : i32
    %c0_i32_1 = arith.constant 0 : i32
    return %c0_i32, %c0_i32_0 : i32, i32
  }
  func.func @transform_2(%arg0: i32, %arg1: i32) -> (i32, i32) {
    %c0_i32 = arith.constant 0 : i32
    %c0_i32_0 = arith.constant 0 : i32
    %c0_i32_1 = arith.constant 0 : i32
    return %c0_i32, %c0_i32_0 : i32, i32
  }
  func.func @transform_3(%arg0: i32, %arg1: i32) -> (i32, i32) {
    %c0_i32 = arith.constant 0 : i32
    %c0_i32_0 = arith.constant 0 : i32
    return %c0_i32, %arg1 : i32, i32
  }
  func.func @transform_4(%arg0: i32, %arg1: i32) -> (i32, i32) {
    %c0_i32 = arith.constant 0 : i32
    %c0_i32_0 = arith.constant 0 : i32
    return %c0_i32, %arg1 : i32, i32
  }
  func.func @transform_5(%arg0: i32, %arg1: i32) -> (i32, i32) {
    %c0_i32 = arith.constant 0 : i32
    return %arg0, %arg1 : i32, i32
  }
}

module attributes {stable_mosaic.version = 11 : i64} {
  func.func @prenorm_kernel(%arg0: i32, %arg1: i32, %arg2: memref<16x128xf32, #tpu.memory_space<vmem>>, %arg3: memref<1x128xf32, #tpu.memory_space<vmem>>, %arg4: memref<1x128xf32, #tpu.memory_space<vmem>>, %arg5: memref<128x128xf32, #tpu.memory_space<vmem>>, %arg6: memref<1x128xf32, #tpu.memory_space<vmem>>, %arg7: memref<16x128xf32, #tpu.memory_space<vmem>>) attributes {dimension_semantics = [#tpu.dimension_semantics<parallel>, #tpu.dimension_semantics<parallel>], iteration_bounds = array<i64: 1, 1>, scalar_prefetch = 0 : i64, scratch_operands = 0 : i64, tpu.core_type = #tpu.core_type<tc>, window_params = [{transform_indices = @transform_0, window_bounds = array<i64: 16, 128>}, {pipeline_mode = #tpu.pipeline_mode<synchronous>, transform_indices = @transform_1, window_bounds = array<i64: 1, 128>}, {pipeline_mode = #tpu.pipeline_mode<synchronous>, transform_indices = @transform_2, window_bounds = array<i64: 1, 128>}, {transform_indices = @transform_3, window_bounds = array<i64: 128, 128>}, {transform_indices = @transform_4, window_bounds = array<i64: 1, 128>}, {transform_indices = @transform_5, window_bounds = array<i64: 16, 128>}]} {
    %c0 = arith.constant 0 : index
    %c0_0 = arith.constant 0 : index
    %0 = vector.load %arg2[%c0, %c0_0] : memref<16x128xf32, #tpu.memory_space<vmem>>, vector<16x128xf32>
    %cst = arith.constant dense<0.000000e+00> : vector<16xf32>
    %1 = vector.multi_reduction <add>, %0, %cst [1] : vector<16x128xf32> to vector<16xf32>
    %2 = vector.shape_cast %1 : vector<16xf32> to vector<16x1xf32>
    %cst_1 = arith.constant 3.125000e-02 : f32
    %3 = vector.broadcast %cst_1 : f32 to vector<16x1xf32>
    %4 = arith.mulf %2, %3 : vector<16x1xf32>
    %5 = vector.broadcast %4 : vector<16x1xf32> to vector<16x128xf32>
    %6 = arith.subf %0, %5 : vector<16x128xf32>
    %7 = arith.mulf %6, %6 : vector<16x128xf32>
    %8 = tpu.iota {dimensions = array<i32: 1>} : vector<16x128xi32>
    %c32_i32 = arith.constant 32 : i32
    %9 = vector.broadcast %c32_i32 : i32 to vector<16x128xi32>
    %10 = arith.cmpi slt, %8, %9 : vector<16x128xi32>
    %cst_2 = arith.constant 0.000000e+00 : f32
    %11 = vector.broadcast %cst_2 : f32 to vector<16x128xf32>
    %12 = arith.select %10, %7, %11 : vector<16x128xi1>, vector<16x128xf32>
    %cst_3 = arith.constant dense<0.000000e+00> : vector<16xf32>
    %13 = vector.multi_reduction <add>, %12, %cst_3 [1] : vector<16x128xf32> to vector<16xf32>
    %14 = vector.shape_cast %13 : vector<16xf32> to vector<16x1xf32>
    %cst_4 = arith.constant 3.125000e-02 : f32
    %15 = vector.broadcast %cst_4 : f32 to vector<16x1xf32>
    %16 = arith.mulf %14, %15 : vector<16x1xf32>
    %cst_5 = arith.constant 9.99999974E-6 : f32
    %17 = vector.broadcast %cst_5 : f32 to vector<16x1xf32>
    %18 = arith.addf %16, %17 : vector<16x1xf32>
    %19 = math.rsqrt %18 : vector<16x1xf32>
    %c0_6 = arith.constant 0 : index
    %c0_7 = arith.constant 0 : index
    %20 = vector.load %arg3[%c0_6, %c0_7] : memref<1x128xf32, #tpu.memory_space<vmem>>, vector<1x128xf32>
    %21 = vector.broadcast %19 : vector<16x1xf32> to vector<16x128xf32>
    %22 = vector.broadcast %20 : vector<1x128xf32> to vector<16x128xf32>
    %23 = arith.mulf %21, %22 : vector<16x128xf32>
    %24 = arith.mulf %6, %23 : vector<16x128xf32>
    %c0_8 = arith.constant 0 : index
    %c0_9 = arith.constant 0 : index
    %25 = vector.load %arg4[%c0_8, %c0_9] : memref<1x128xf32, #tpu.memory_space<vmem>>, vector<1x128xf32>
    %26 = vector.broadcast %25 : vector<1x128xf32> to vector<16x128xf32>
    %27 = arith.addf %24, %26 : vector<16x128xf32>
    %c0_10 = arith.constant 0 : index
    %c0_11 = arith.constant 0 : index
    %28 = vector.load %arg5[%c0_10, %c0_11] : memref<128x128xf32, #tpu.memory_space<vmem>>, vector<128x128xf32>
    %cst_12 = arith.constant dense<0.000000e+00> : vector<16x128xf32>
    %29 = tpu.matmul %27, %28, %cst_12 {dimension_numbers = #tpu.dot_dimension_numbers<[1], [0], [0], [1], [0, 0, 1, 1], [], []>} : vector<16x128xf32>, vector<128x128xf32>, vector<16x128xf32> -> vector<16x128xf32>
    %c0_13 = arith.constant 0 : index
    %c0_14 = arith.constant 0 : index
    %30 = vector.load %arg6[%c0_13, %c0_14] : memref<1x128xf32, #tpu.memory_space<vmem>>, vector<1x128xf32>
    %31 = vector.broadcast %30 : vector<1x128xf32> to vector<16x128xf32>
    %32 = arith.addf %29, %31 : vector<16x128xf32>
    %c0_15 = arith.constant 0 : index
    %c0_16 = arith.constant 0 : index
    %33 = vector.load %arg7[%c0_15, %c0_16] : memref<16x128xf32, #tpu.memory_space<vmem>>, vector<16x128xf32>
    tpu.vector_store %arg7[%c0_15, %c0_16], %32 {strides = array<i32>} : memref<16x128xf32, #tpu.memory_space<vmem>>, vector<16x128xf32>,
    return
  }
  func.func @transform_0(%arg0: i32, %arg1: i32) -> (i32, i32) {
    %c0_i32 = arith.constant 0 : i32
    %c0_i32_0 = arith.constant 0 : i32
    return %arg0, %c0_i32 : i32, i32
  }
  func.func @transform_1(%arg0: i32, %arg1: i32) -> (i32, i32) {
    %c0_i32 = arith.constant 0 : i32
    %c0_i32_0 = arith.constant 0 : i32
    %c0_i32_1 = arith.constant 0 : i32
    return %c0_i32, %c0_i32_0 : i32, i32
  }
  func.func @transform_2(%arg0: i32, %arg1: i32) -> (i32, i32) {
    %c0_i32 = arith.constant 0 : i32
    %c0_i32_0 = arith.constant 0 : i32
    %c0_i32_1 = arith.constant 0 : i32
    return %c0_i32, %c0_i32_0 : i32, i32
  }
  func.func @transform_3(%arg0: i32, %arg1: i32) -> (i32, i32) {
    %c0_i32 = arith.constant 0 : i32
    %c0_i32_0 = arith.constant 0 : i32
    return %c0_i32, %arg1 : i32, i32
  }
  func.func @transform_4(%arg0: i32, %arg1: i32) -> (i32, i32) {
    %c0_i32 = arith.constant 0 : i32
    %c0_i32_0 = arith.constant 0 : i32
    return %c0_i32, %arg1 : i32, i32
  }
  func.func @transform_5(%arg0: i32, %arg1: i32) -> (i32, i32) {
    %c0_i32 = arith.constant 0 : i32
    return %arg0, %arg1 : i32, i32
  }
}

</mosaic_0001>

<llo_original>
// kernel: tpu_custom_call.1
$region0: #{tpu_custom_call.1}
  #allocation0 [shape = 'u32[]', space=smem, size = 0x4, offset = 0x4, fixed_abs, tag = 'smem constant byte address 0x4 - core index']
  #allocation1 [shape = 'u32[144,128]{1,0:T(1,128)}', space=vmem, size = 0x12000, scoped, tag = 'internal scratch']
  %s0 = inlined_call_operand.hbm [shape: f32[16,128], index: 0, kind: input, shape index: {}]
  %s1 = inlined_call_operand.vmem [shape: f32[1,128], index: 1, kind: input, shape index: {}]
  %s2 = inlined_call_operand.vmem [shape: f32[1,128], index: 2, kind: input, shape index: {}]
  %s3 = inlined_call_operand.hbm [shape: f32[128,128], index: 3, kind: input, shape index: {}]
  %s4 = inlined_call_operand.vmem [shape: f32[1,128], index: 4, kind: input, shape index: {}]
  %s5 = inlined_call_operand.hbm [shape: f32[16,128], index: 5, kind: output, shape index: {}]
  %s6 = sld [smem:[#allocation0]]
  $region38: #{tpu_custom_call.1} parent=0
    _
  %s8 = ssub.s32 1, %s6
  %s9 = scalar_select 0, %s8, %s6
  $region1: #{tpu_custom_call.1} parent=0
    #allocation2 [shape = 'u8[8192]{0}', space=vmem, size = 0x2000, scoped, tag = 'input window, operand 0, single buffered']
    #allocation3 [shape = 's32[1]{0}', space=sflag, size = 0x4, scoped, tag = 'scoped memory for tpu_custom_call.1']
    #allocation4 [shape = 's32[1]{0}', space=sflag, size = 0x4, scoped, tag = 'scoped memory for tpu_custom_call.1']
    #allocation5 [shape = 'u8[65536]{0}', space=vmem, size = 0x10000, scoped, tag = 'input window, operand 3, single buffered']
    #allocation6 [shape = 's32[1]{0}', space=sflag, size = 0x4, scoped, tag = 'scoped memory for tpu_custom_call.1']
    #allocation7 [shape = 'u8[8192]{0}', space=vmem, size = 0x2000, scoped, tag = 'output window, operand 0, single buffered']
    %10 = vsyncpa [#allocation3], 0
    %11 = vsyncpa [#allocation6], 0
    %12 = vsyncpa [#allocation4], 0
    // Predicated region
    $region2: #{tpu_custom_call.1} parent=1 // pred_check
      _
    $region3: #{tpu_custom_call.1} parent=1 // pred_check_branch
      %14 = sbr.rel (0) target = $region5
    $region4: #{tpu_custom_call.1} parent=1 // pred_region
      %s16 = ssub.s32 256, 256
      %17 = vsyncadd [#allocation3], %s16
      %s18 = sshll.u32 [#allocation2], 4
      %s19 = int_to_ptr.vmem [resolvable:$true] %s18
      %24 = dma.hbm_to_vmem [thread:$0]  %s0, 256, %s19, [#allocation3], 128, 128, 8
    $region5: #{tpu_custom_call.1} parent=1 // pred_fallthru
      _
    // Predicated region
    $region6: #{tpu_custom_call.1} parent=1 // pred_check
      _
    $region7: #{tpu_custom_call.1} parent=1 // pred_check_branch
      %26 = sbr.rel (0) target = $region9
    $region8: #{tpu_custom_call.1} parent=1 // pred_region
      _
    $region9: #{tpu_custom_call.1} parent=1 // pred_fallthru
      _
    // Predicated region
    $region10: #{tpu_custom_call.1} parent=1 // pred_check
      _
    $region11: #{tpu_custom_call.1} parent=1 // pred_check_branch
      %28 = sbr.rel (0) target = $region13
    $region12: #{tpu_custom_call.1} parent=1 // pred_region
      _
    $region13: #{tpu_custom_call.1} parent=1 // pred_fallthru
      _
    // Predicated region
    $region14: #{tpu_custom_call.1} parent=1 // pred_check
      _
    $region15: #{tpu_custom_call.1} parent=1 // pred_check_branch
      %30 = sbr.rel (0) target = $region17
    $region16: #{tpu_custom_call.1} parent=1 // pred_region
      %s32 = ssub.s32 2048, 2048
      %33 = vsyncadd [#allocation6], %s32
      %s34 = sshll.u32 [#allocation5], 4
      %s35 = int_to_ptr.vmem [resolvable:$true] %s34
      %40 = dma.hbm_to_vmem [thread:$0]  %s3, 2048, %s35, [#allocation6], 128, 128, 8
    $region17: #{tpu_custom_call.1} parent=1 // pred_fallthru
      _
    // Predicated region
    $region18: #{tpu_custom_call.1} parent=1 // pred_check
      _
    $region19: #{tpu_custom_call.1} parent=1 // pred_check_branch
      %42 = sbr.rel (0) target = $region21
    $region20: #{tpu_custom_call.1} parent=1 // pred_region
      _
    $region21: #{tpu_custom_call.1} parent=1 // pred_fallthru
      _
    // Predicated region
    $region22: #{tpu_custom_call.1} parent=1 // pred_check
      _
    $region23: #{tpu_custom_call.1} parent=1 // pred_check_branch
      %44 = sbr.rel (0) target = $region25
    $region24: #{tpu_custom_call.1} parent=1 // pred_region
      %45 = dma.done [#allocation3], 256
    $region25: #{tpu_custom_call.1} parent=1 // pred_fallthru
      _
    // Predicated region
    $region26: #{tpu_custom_call.1} parent=1 // pred_check
      _
    $region27: #{tpu_custom_call.1} parent=1 // pred_check_branch
      %47 = sbr.rel (0) target = $region29
    $region28: #{tpu_custom_call.1} parent=1 // pred_region
      %48 = dma.done [#allocation6], 2048
    $region29: #{tpu_custom_call.1} parent=1 // pred_fallthru
      _
    %v49 = vld [vmem:[#allocation2] sm:$0xff]
    %v50 = vld [vmem:[#allocation2 + $0x8] sm:$0xff]
    %51 = vadd.xlane.f32.xlu0 %v49
    %v52 = vpop.xlane.xlu0 %51
    %53 = vadd.xlane.f32.xlu0 %v50
    %v54 = vpop.xlane.xlu0 %53
    %v55 = vmul.f32 %v52, 0.03125
    %v56 = vmul.f32 %v54, 0.03125
    %v57 = vsub.f32 %v49, %v55
    %v58 = vsub.f32 %v50, %v56
    %v59 = vmul.f32 %v57, %v57
    %v60 = vmul.f32 %v58, %v58
    %v61 = vlaneseq
    %v62 = vand.u32 %v61, 127
    %vm63 = vcmp.lt.s32.totalorder %v62, 32
    %v64 = vsel %vm63, %v59, 0.0
    %v65 = vsel %vm63, %v60, 0.0
    %66 = vadd.xlane.f32.xlu0 %v64
    %v67 = vpop.xlane.xlu0 %66
    %68 = vadd.xlane.f32.xlu0 %v65
    %v69 = vpop.xlane.xlu0 %68
    %v70 = vmul.f32 %v67, 0.03125
    %v71 = vmul.f32 %v69, 0.03125
    %v72 = vadd.f32 %v70, 1e-05
    %v73 = vadd.f32 %v71, 1e-05
    %v74 = vrsqrt.pop %v72
    %v75 = vrsqrt.pop %v73
    %v76 = vld [vmem:[%s1] sm:$0x1]
    %v78 = vlaneseq
    %v79 = vshrl.u32 %v78, 7
    %v80 = vsub.s32 0, %v79
    %v81 = vrot.slane %v76, %v80
    %v83 = vmul.f32 %v74, %v81
    %v84 = vmul.f32 %v75, %v81
    %v85 = vmul.f32 %v57, %v83
    %v86 = vmul.f32 %v58, %v84
    %v87 = vld [vmem:[%s2] sm:$0x1]
    %v89 = vlaneseq
    %v90 = vshrl.u32 %v89, 7
    %v91 = vsub.s32 0, %v90
    %v92 = vrot.slane %v87, %v91
    %v94 = vadd.f32 %v85, %v92
    %v95 = vadd.f32 %v86, %v92
    %v96 = vld [vmem:[#allocation5] sm:$0xff]
    %v97 = vld [vmem:[#allocation5 + $0x8] sm:$0xff]
    %v98 = vld [vmem:[#allocation5 + $0x10] sm:$0xff]
    %v99 = vld [vmem:[#allocation5 + $0x18] sm:$0xff]
    %v100 = vld [vmem:[#allocation5 + $0x20] sm:$0xff]
    %v101 = vld [vmem:[#allocation5 + $0x28] sm:$0xff]
    %v102 = vld [vmem:[#allocation5 + $0x30] sm:$0xff]
    %v103 = vld [vmem:[#allocation5 + $0x38] sm:$0xff]
    %v104 = vld [vmem:[#allocation5 + $0x40] sm:$0xff]
    %v105 = vld [vmem:[#allocation5 + $0x48] sm:$0xff]
    %v106 = vld [vmem:[#allocation5 + $0x50] sm:$0xff]
    %v107 = vld [vmem:[#allocation5 + $0x58] sm:$0xff]
    %v108 = vld [vmem:[#allocation5 + $0x60] sm:$0xff]
    %v109 = vld [vmem:[#allocation5 + $0x68] sm:$0xff]
    %v110 = vld [vmem:[#allocation5 + $0x70] sm:$0xff]
    %v111 = vld [vmem:[#allocation5 + $0x78] sm:$0xff]
    %v112 = vld [vmem:[%s4] sm:$0x1]
    %v114 = vlaneseq
    %v115 = vshrl.u32 %v114, 7
    %v116 = vsub.s32 0, %v115
    %v117 = vrot.slane %v112, %v116
    %119 = vmatprep.subr.mxu0 0.0
    %120 = vmatpush1.msra.mxu0 %v111
    %121 = vmatprep.subr.mxu0 0.0
    %122 = vmatpush1.msra.mxu0 %v110
    %123 = vmatprep.subr.mxu0 0.0
    %124 = vmatpush1.msra.mxu0 %v109
    %125 = vmatprep.subr.mxu0 0.0
    %126 = vmatpush1.msra.mxu0 %v108
    %127 = vmatprep.subr.mxu0 0.0
    %128 = vmatpush1.msra.mxu0 %v107
    %129 = vmatprep.subr.mxu0 0.0
    %130 = vmatpush1.msra.mxu0 %v106
    %131 = vmatprep.subr.mxu0 0.0
    %132 = vmatpush1.msra.mxu0 %v105
    %133 = vmatprep.subr.mxu0 0.0
    %134 = vmatpush1.msra.mxu0 %v104
    %135 = vmatprep.subr.mxu0 0.0
    %136 = vmatpush1.msra.mxu0 %v103
    %137 = vmatprep.subr.mxu0 0.0
    %138 = vmatpush1.msra.mxu0 %v102
    %139 = vmatprep.subr.mxu0 0.0
    %140 = vmatpush1.msra.mxu0 %v101
    %141 = vmatprep.subr.mxu0 0.0
    %142 = vmatpush1.msra.mxu0 %v100
    %143 = vmatprep.subr.mxu0 0.0
    %144 = vmatpush1.msra.mxu0 %v99
    %145 = vmatprep.subr.mxu0 0.0
    %146 = vmatpush1.msra.mxu0 %v98
    %147 = vmatprep.subr.mxu0 0.0
    %148 = vmatpush1.msra.mxu0 %v97
    %149 = vmatprep.subr.mxu0 0.0
    %150 = vmatpush1.msra.mxu0 %v96
    %151 = vmatprep.subr.mxu0 0.0
    %152 = vmatpush2.msra.mxu0 0.0
    %153 = vmatprep.subr.mxu0 0.0
    %154 = vmatpush2.msra.mxu0 0.0
    %155 = vmatprep.subr.mxu0 0.0
    %156 = vmatpush2.msra.mxu0 0.0
    %157 = vmatprep.subr.mxu0 0.0
    %158 = vmatpush2.msra.mxu0 0.0
    %159 = vmatprep.subr.mxu0 0.0
    %160 = vmatpush2.msra.mxu0 0.0
    %161 = vmatprep.subr.mxu0 0.0
    %162 = vmatpush2.msra.mxu0 0.0
    %163 = vmatprep.subr.mxu0 0.0
    %164 = vmatpush2.msra.mxu0 0.0
    %165 = vmatprep.subr.mxu0 0.0
    %166 = vmatpush2.msra.mxu0 0.0
    %167 = vmatprep.subr.mxu0 0.0
    %168 = vmatpush2.msra.mxu0 0.0
    %169 = vmatprep.subr.mxu0 0.0
    %170 = vmatpush2.msra.mxu0 0.0
    %171 = vmatprep.subr.mxu0 0.0
    %172 = vmatpush2.msra.mxu0 0.0
    %173 = vmatprep.subr.mxu0 0.0
    %174 = vmatpush2.msra.mxu0 0.0
    %175 = vmatprep.subr.mxu0 0.0
    %176 = vmatpush2.msra.mxu0 0.0
    %177 = vmatprep.subr.mxu0 0.0
    %178 = vmatpush2.msra.mxu0 0.0
    %179 = vmatprep.subr.mxu0 0.0
    %180 = vmatpush2.msra.mxu0 0.0
    %181 = vmatprep.subr.mxu0 0.0
    %182 = vmatpush2.msra.mxu0 0.0
    %183 = vmatprep.mubr.f32.mxu0 0.0
    %184 = vmatmul.mubr.f32.gmra.mxu0 %v94
    %v185 = vpop.f32.mrf.mxu0
    %v186 = vadd.f32 %v117, %v185
    %v187 = vpop.f32.mrf.mxu0
    %188 = vmatprep.mubr.f32.mxu0 0.0
    %189 = vmatmul.mubr.f32.gmra.mxu0 %v95
    %v190 = vpop.f32.mrf.mxu0
    %v191 = vadd.f32 %v117, %v190
    %v192 = vpop.f32.mrf.mxu0
    %193 = vdwg.mxu0
    %194 = vst [vmem:[#allocation7] sm:$0xff] %v186
    %195 = vst [vmem:[#allocation7 + $0x8] sm:$0xff] %v191
    // Predicated region
    $region30: #{tpu_custom_call.1} parent=1 // pred_check
      _
    $region31: #{tpu_custom_call.1} parent=1 // pred_check_branch
      %197 = sbr.rel (0) target = $region33
    $region32: #{tpu_custom_call.1} parent=1 // pred_region
      %s199 = ssub.s32 256, 256
      %200 = vsyncadd [#allocation4], %s199
      %s201 = sshll.u32 [#allocation7], 4
      %s202 = int_to_ptr.vmem [resolvable:$true] %s201
      %207 = dma.vmem_to_hbm [thread:$0]  %s202, 256, %s5, [#allocation4], 128, 128, 8
    $region33: #{tpu_custom_call.1} parent=1 // pred_fallthru
      _
    // Predicated region
    $region34: #{tpu_custom_call.1} parent=1 // pred_check
      _
    $region35: #{tpu_custom_call.1} parent=1 // pred_check_branch
      %209 = sbr.rel (0) target = $region37
    $region36: #{tpu_custom_call.1} parent=1 // pred_region
      %210 = dma.done [#allocation4], 256
    $region37: #{tpu_custom_call.1} parent=1 // pred_fallthru
      _
    %211 = vsyncpa [#allocation3], 1
    %212 = vsyncpa [#allocation6], 1
    %213 = vsyncpa [#allocation4], 1

// kernel: tpu_custom_call.1
$region0: #{tpu_custom_call.1}
  #allocation0 [shape = 'u32[]', space=smem, size = 0x4, offset = 0x4, fixed_abs, tag = 'smem constant byte address 0x4 - core index']
  #allocation1 [shape = 'u32[144,128]{1,0:T(1,128)}', space=vmem, size = 0x12000, scoped, tag = 'internal scratch']
  %s0 = inlined_call_operand.hbm [shape: f32[16,128], index: 0, kind: input, shape index: {}]
  %s1 = inlined_call_operand.vmem [shape: f32[1,128], index: 1, kind: input, shape index: {}]
  %s2 = inlined_call_operand.vmem [shape: f32[1,128], index: 2, kind: input, shape index: {}]
  %s3 = inlined_call_operand.hbm [shape: f32[128,128], index: 3, kind: input, shape index: {}]
  %s4 = inlined_call_operand.vmem [shape: f32[1,128], index: 4, kind: input, shape index: {}]
  %s5 = inlined_call_operand.hbm [shape: f32[16,128], index: 5, kind: output, shape index: {}]
  %s6 = sld [smem:[#allocation0]]
  $region38: #{tpu_custom_call.1} parent=0
    _
  %s8 = ssub.s32 1, %s6
  %s9 = scalar_select 0, %s8, %s6
  $region1: #{tpu_custom_call.1} parent=0
    #allocation2 [shape = 'u8[8192]{0}', space=vmem, size = 0x2000, scoped, tag = 'input window, operand 0, single buffered']
    #allocation3 [shape = 's32[1]{0}', space=sflag, size = 0x4, scoped, tag = 'scoped memory for tpu_custom_call.1']
    #allocation4 [shape = 's32[1]{0}', space=sflag, size = 0x4, scoped, tag = 'scoped memory for tpu_custom_call.1']
    #allocation5 [shape = 'u8[65536]{0}', space=vmem, size = 0x10000, scoped, tag = 'input window, operand 3, single buffered']
    #allocation6 [shape = 's32[1]{0}', space=sflag, size = 0x4, scoped, tag = 'scoped memory for tpu_custom_call.1']
    #allocation7 [shape = 'u8[8192]{0}', space=vmem, size = 0x2000, scoped, tag = 'output window, operand 0, single buffered']
    %10 = vsyncpa [#allocation3], 0
    %11 = vsyncpa [#allocation6], 0
    %12 = vsyncpa [#allocation4], 0
    // Predicated region
    $region2: #{tpu_custom_call.1} parent=1 // pred_check
      _
    $region3: #{tpu_custom_call.1} parent=1 // pred_check_branch
      %14 = sbr.rel (0) target = $region5
    $region4: #{tpu_custom_call.1} parent=1 // pred_region
      %s16 = ssub.s32 256, 256
      %17 = vsyncadd [#allocation3], %s16
      %s18 = sshll.u32 [#allocation2], 4
      %s19 = int_to_ptr.vmem [resolvable:$true] %s18
      %24 = dma.hbm_to_vmem [thread:$0]  %s0, 256, %s19, [#allocation3], 128, 128, 8
    $region5: #{tpu_custom_call.1} parent=1 // pred_fallthru
      _
    // Predicated region
    $region6: #{tpu_custom_call.1} parent=1 // pred_check
      _
    $region7: #{tpu_custom_call.1} parent=1 // pred_check_branch
      %26 = sbr.rel (0) target = $region9
    $region8: #{tpu_custom_call.1} parent=1 // pred_region
      _
    $region9: #{tpu_custom_call.1} parent=1 // pred_fallthru
      _
    // Predicated region
    $region10: #{tpu_custom_call.1} parent=1 // pred_check
      _
    $region11: #{tpu_custom_call.1} parent=1 // pred_check_branch
      %28 = sbr.rel (0) target = $region13
    $region12: #{tpu_custom_call.1} parent=1 // pred_region
      _
    $region13: #{tpu_custom_call.1} parent=1 // pred_fallthru
      _
    // Predicated region
    $region14: #{tpu_custom_call.1} parent=1 // pred_check
      _
    $region15: #{tpu_custom_call.1} parent=1 // pred_check_branch
      %30 = sbr.rel (0) target = $region17
    $region16: #{tpu_custom_call.1} parent=1 // pred_region
      %s32 = ssub.s32 2048, 2048
      %33 = vsyncadd [#allocation6], %s32
      %s34 = sshll.u32 [#allocation5], 4
      %s35 = int_to_ptr.vmem [resolvable:$true] %s34
      %40 = dma.hbm_to_vmem [thread:$0]  %s3, 2048, %s35, [#allocation6], 128, 128, 8
    $region17: #{tpu_custom_call.1} parent=1 // pred_fallthru
      _
    // Predicated region
    $region18: #{tpu_custom_call.1} parent=1 // pred_check
      _
    $region19: #{tpu_custom_call.1} parent=1 // pred_check_branch
      %42 = sbr.rel (0) target = $region21
    $region20: #{tpu_custom_call.1} parent=1 // pred_region
      _
    $region21: #{tpu_custom_call.1} parent=1 // pred_fallthru
      _
    // Predicated region
    $region22: #{tpu_custom_call.1} parent=1 // pred_check
      _
    $region23: #{tpu_custom_call.1} parent=1 // pred_check_branch
      %44 = sbr.rel (0) target = $region25
    $region24: #{tpu_custom_call.1} parent=1 // pred_region
      %45 = dma.done [#allocation3], 256
    $region25: #{tpu_custom_call.1} parent=1 // pred_fallthru
      _
    // Predicated region
    $region26: #{tpu_custom_call.1} parent=1 // pred_check
      _
    $region27: #{tpu_custom_call.1} parent=1 // pred_check_branch
      %47 = sbr.rel (0) target = $region29
    $region28: #{tpu_custom_call.1} parent=1 // pred_region
      %48 = dma.done [#allocation6], 2048
    $region29: #{tpu_custom_call.1} parent=1 // pred_fallthru
      _
    %v49 = vld [vmem:[#allocation2] sm:$0xff]
    %v50 = vld [vmem:[#allocation2 + $0x8] sm:$0xff]
    %51 = vadd.xlane.f32.xlu0 %v49
    %v52 = vpop.xlane.xlu0 %51
    %53 = vadd.xlane.f32.xlu0 %v50
    %v54 = vpop.xlane.xlu0 %53
    %v55 = vmul.f32 %v52, 0.03125
    %v56 = vmul.f32 %v54, 0.03125
    %v57 = vsub.f32 %v49, %v55
    %v58 = vsub.f32 %v50, %v56
    %v59 = vmul.f32 %v57, %v57
    %v60 = vmul.f32 %v58, %v58
    %v61 = vlaneseq
    %v62 = vand.u32 %v61, 127
    %vm63 = vcmp.lt.s32.totalorder %v62, 32
    %v64 = vsel %vm63, %v59, 0.0
    %v65 = vsel %vm63, %v60, 0.0
    %66 = vadd.xlane.f32.xlu0 %v64
    %v67 = vpop.xlane.xlu0 %66
    %68 = vadd.xlane.f32.xlu0 %v65
    %v69 = vpop.xlane.xlu0 %68
    %v70 = vmul.f32 %v67, 0.03125
    %v71 = vmul.f32 %v69, 0.03125
    %v72 = vadd.f32 %v70, 1e-05
    %v73 = vadd.f32 %v71, 1e-05
    %v74 = vrsqrt.pop %v72
    %v75 = vrsqrt.pop %v73
    %v76 = vld [vmem:[%s1] sm:$0x1]
    %v78 = vlaneseq
    %v79 = vshrl.u32 %v78, 7
    %v80 = vsub.s32 0, %v79
    %v81 = vrot.slane %v76, %v80
    %v83 = vmul.f32 %v74, %v81
    %v84 = vmul.f32 %v75, %v81
    %v85 = vmul.f32 %v57, %v83
    %v86 = vmul.f32 %v58, %v84
    %v87 = vld [vmem:[%s2] sm:$0x1]
    %v89 = vlaneseq
    %v90 = vshrl.u32 %v89, 7
    %v91 = vsub.s32 0, %v90
    %v92 = vrot.slane %v87, %v91
    %v94 = vadd.f32 %v85, %v92
    %v95 = vadd.f32 %v86, %v92
    %v96 = vld [vmem:[#allocation5] sm:$0xff]
    %v97 = vld [vmem:[#allocation5 + $0x8] sm:$0xff]
    %v98 = vld [vmem:[#allocation5 + $0x10] sm:$0xff]
    %v99 = vld [vmem:[#allocation5 + $0x18] sm:$0xff]
    %v100 = vld [vmem:[#allocation5 + $0x20] sm:$0xff]
    %v101 = vld [vmem:[#allocation5 + $0x28] sm:$0xff]
    %v102 = vld [vmem:[#allocation5 + $0x30] sm:$0xff]
    %v103 = vld [vmem:[#allocation5 + $0x38] sm:$0xff]
    %v104 = vld [vmem:[#allocation5 + $0x40] sm:$0xff]
    %v105 = vld [vmem:[#allocation5 + $0x48] sm:$0xff]
    %v106 = vld [vmem:[#allocation5 + $0x50] sm:$0xff]
    %v107 = vld [vmem:[#allocation5 + $0x58] sm:$0xff]
    %v108 = vld [vmem:[#allocation5 + $0x60] sm:$0xff]
    %v109 = vld [vmem:[#allocation5 + $0x68] sm:$0xff]
    %v110 = vld [vmem:[#allocation5 + $0x70] sm:$0xff]
    %v111 = vld [vmem:[#allocation5 + $0x78] sm:$0xff]
    %v112 = vld [vmem:[%s4] sm:$0x1]
    %v114 = vlaneseq
    %v115 = vshrl.u32 %v114, 7
    %v116 = vsub.s32 0, %v115
    %v117 = vrot.slane %v112, %v116
    %119 = vmatprep.subr.mxu0 0.0
    %120 = vmatpush1.msra.mxu0 %v111
    %121 = vmatprep.subr.mxu0 0.0
    %122 = vmatpush1.msra.mxu0 %v110
    %123 = vmatprep.subr.mxu0 0.0
    %124 = vmatpush1.msra.mxu0 %v109
    %125 = vmatprep.subr.mxu0 0.0
    %126 = vmatpush1.msra.mxu0 %v108
    %127 = vmatprep.subr.mxu0 0.0
    %128 = vmatpush1.msra.mxu0 %v107
    %129 = vmatprep.subr.mxu0 0.0
    %130 = vmatpush1.msra.mxu0 %v106
    %131 = vmatprep.subr.mxu0 0.0
    %132 = vmatpush1.msra.mxu0 %v105
    %133 = vmatprep.subr.mxu0 0.0
    %134 = vmatpush1.msra.mxu0 %v104
    %135 = vmatprep.subr.mxu0 0.0
    %136 = vmatpush1.msra.mxu0 %v103
    %137 = vmatprep.subr.mxu0 0.0
    %138 = vmatpush1.msra.mxu0 %v102
    %139 = vmatprep.subr.mxu0 0.0
    %140 = vmatpush1.msra.mxu0 %v101
    %141 = vmatprep.subr.mxu0 0.0
    %142 = vmatpush1.msra.mxu0 %v100
    %143 = vmatprep.subr.mxu0 0.0
    %144 = vmatpush1.msra.mxu0 %v99
    %145 = vmatprep.subr.mxu0 0.0
    %146 = vmatpush1.msra.mxu0 %v98
    %147 = vmatprep.subr.mxu0 0.0
    %148 = vmatpush1.msra.mxu0 %v97
    %149 = vmatprep.subr.mxu0 0.0
    %150 = vmatpush1.msra.mxu0 %v96
    %151 = vmatprep.subr.mxu0 0.0
    %152 = vmatpush2.msra.mxu0 0.0
    %153 = vmatprep.subr.mxu0 0.0
    %154 = vmatpush2.msra.mxu0 0.0
    %155 = vmatprep.subr.mxu0 0.0
    %156 = vmatpush2.msra.mxu0 0.0
    %157 = vmatprep.subr.mxu0 0.0
    %158 = vmatpush2.msra.mxu0 0.0
    %159 = vmatprep.subr.mxu0 0.0
    %160 = vmatpush2.msra.mxu0 0.0
    %161 = vmatprep.subr.mxu0 0.0
    %162 = vmatpush2.msra.mxu0 0.0
    %163 = vmatprep.subr.mxu0 0.0
    %164 = vmatpush2.msra.mxu0 0.0
    %165 = vmatprep.subr.mxu0 0.0
    %166 = vmatpush2.msra.mxu0 0.0
    %167 = vmatprep.subr.mxu0 0.0
    %168 = vmatpush2.msra.mxu0 0.0
    %169 = vmatprep.subr.mxu0 0.0
    %170 = vmatpush2.msra.mxu0 0.0
    %171 = vmatprep.subr.mxu0 0.0
    %172 = vmatpush2.msra.mxu0 0.0
    %173 = vmatprep.subr.mxu0 0.0
    %174 = vmatpush2.msra.mxu0 0.0
    %175 = vmatprep.subr.mxu0 0.0
    %176 = vmatpush2.msra.mxu0 0.0
    %177 = vmatprep.subr.mxu0 0.0
    %178 = vmatpush2.msra.mxu0 0.0
    %179 = vmatprep.subr.mxu0 0.0
    %180 = vmatpush2.msra.mxu0 0.0
    %181 = vmatprep.subr.mxu0 0.0
    %182 = vmatpush2.msra.mxu0 0.0
    %183 = vmatprep.mubr.f32.mxu0 0.0
    %184 = vmatmul.mubr.f32.gmra.mxu0 %v94
    %v185 = vpop.f32.mrf.mxu0
    %v186 = vadd.f32 %v117, %v185
    %v187 = vpop.f32.mrf.mxu0
    %188 = vmatprep.mubr.f32.mxu0 0.0
    %189 = vmatmul.mubr.f32.gmra.mxu0 %v95
    %v190 = vpop.f32.mrf.mxu0
    %v191 = vadd.f32 %v117, %v190
    %v192 = vpop.f32.mrf.mxu0
    %193 = vdwg.mxu0
    %194 = vst [vmem:[#allocation7] sm:$0xff] %v186
    %195 = vst [vmem:[#allocation7 + $0x8] sm:$0xff] %v191
    // Predicated region
    $region30: #{tpu_custom_call.1} parent=1 // pred_check
      _
    $region31: #{tpu_custom_call.1} parent=1 // pred_check_branch
      %197 = sbr.rel (0) target = $region33
    $region32: #{tpu_custom_call.1} parent=1 // pred_region
      %s199 = ssub.s32 256, 256
      %200 = vsyncadd [#allocation4], %s199
      %s201 = sshll.u32 [#allocation7], 4
      %s202 = int_to_ptr.vmem [resolvable:$true] %s201
      %207 = dma.vmem_to_hbm [thread:$0]  %s202, 256, %s5, [#allocation4], 128, 128, 8
    $region33: #{tpu_custom_call.1} parent=1 // pred_fallthru
      _
    // Predicated region
    $region34: #{tpu_custom_call.1} parent=1 // pred_check
      _
    $region35: #{tpu_custom_call.1} parent=1 // pred_check_branch
      %209 = sbr.rel (0) target = $region37
    $region36: #{tpu_custom_call.1} parent=1 // pred_region
      %210 = dma.done [#allocation4], 256
    $region37: #{tpu_custom_call.1} parent=1 // pred_fallthru
      _
    %211 = vsyncpa [#allocation3], 1
    %212 = vsyncpa [#allocation6], 1
    %213 = vsyncpa [#allocation4], 1

</llo_original>
